<compile_context>
chip_gen: v7x
topology: tpu7x:2x2x1
jax: 0.10.0
libtpu: 0.0.40
codegen_flags: <defaults>
</compile_context>

<pallas_src>
import functools

import jax
import jax.numpy as jnp
from jax.experimental import pallas as pl
from jax.experimental.pallas import tpu as pltpu


def _conv_bn_relu_kernel(x_ref, w_ref, b_ref, o_ref, xp_ref, col_ref, *,
                         K, H, W, Wp, pad, Lout):
    """One batch image per grid step.

    x_ref  : (1, Cin, H*W)    unpadded image, channels-major, pixels on lanes
    w_ref  : (Cout, K*K*Cin)  BN-folded conv weight, bf16, tap-major / cin-minor
    b_ref  : (Cout, 1)        BN-folded per-channel bias, f32
    o_ref  : (1, Cout, H*Wp)  outputs in padded-row flat layout
    xp_ref : (Cin, Lxp)       VMEM scratch: zero-padded flat image
    col_ref: (K*K*Cin, Lout)  VMEM scratch: im2col-over-contraction operand
    """
    cin = x_ref.shape[1]

    # ---- 1) Zero-padded, channels-major flat image built in VMEM (replaces the
    #         wrapper-side jnp.pad -> saves a full HBM read+write of the input).
    xp_ref[...] = jnp.zeros_like(xp_ref)
    for h in range(H):                                   # statically unrolled VMEM-only row copies
        xp_ref[:, pl.ds((h + pad) * Wp + pad, W)] = x_ref[0, :, pl.ds(h * W, W)]

    # ---- 2) im2col over the contraction dim: stack the K*K statically shifted views so
    #         the conv becomes ONE deep matmul (contraction K*K*Cin) instead of K*K shallow ones.
    for dy in range(K):
        for dx in range(K):
            k = dy * K + dx
            col_ref[pl.ds(k * cin, cin), :] = xp_ref[:, pl.ds(dy * Wp + dx, Lout)]

    # ---- 3) Single MXU matmul: bf16 operands, f32 accumulation, then bias + ReLU.
    acc = jnp.dot(w_ref[...], col_ref[...].astype(jnp.bfloat16),
                  preferred_element_type=jnp.float32)    # (Cout, Lout)
    acc += b_ref[...]                                    # (Cout, 1) broadcast over lanes
    o_ref[0] = jnp.maximum(acc, 0.0).astype(o_ref.dtype)


def conv_bn_relu_forward(x_nchw, params, *, eps=1e-5):
    """x_nchw: (N, Cin, H, W). Returns ReLU(BN_eval(Conv2d_same(x))) as (N, Cout, H, W)."""
    N, Cin, H, W = x_nchw.shape
    w = params["w"]                                      # (Cout, Cin, K, K), PyTorch layout
    Cout, _, K, _ = w.shape
    assert K in (1, 3), "ConvBNRelu 'same' padding is only defined for kernel in {1, 3}"
    pad = 0 if K == 1 else 1

    # ---- Fold BatchNorm (eval) into the conv weight + per-channel bias (conv has bias=False).
    scale = params["gamma"] * jax.lax.rsqrt(params["var"] + eps)            # (Cout,)
    w_eff = w * scale[:, None, None, None]
    b_eff = params["beta"] - params["mean"] * scale                         # (Cout,)
    # (Cout, Cin, K, K) -> (Cout, K*K*Cin), tap-major / cin-minor: matches the im2col rows.
    w2d = jnp.transpose(w_eff, (0, 2, 3, 1)).reshape(Cout, K * K * Cin).astype(jnp.bfloat16)
    b_col = b_eff.reshape(Cout, 1).astype(jnp.float32)

    # ---- Flat layouts (free minor-dim collapses only; NO jnp.pad HBM pass on the input).
    Wp = W + 2 * pad
    Lout = H * Wp                         # padded-row output span -> free reshape to (H, Wp)
    Lxp = Lout + (K - 1) * (Wp + 1)       # flat span the shifted taps read (zero tail)
    x_flat = x_nchw.reshape(N, Cin, H * W)

    # ---- VMEM budget: double-buffered in/out blocks + resident weights + f32 scratch.
    itemsize = jnp.dtype(x_nchw.dtype).itemsize
    footprint = (2 * Cin * H * W * itemsize              # input block (double-buffered)
                 + 2 * Cout * Lout * itemsize            # output block (double-buffered)
                 + 2 * (Cout * K * K * Cin * 2 + Cout * 4)   # resident weights / bias
                 + (Cin * Lxp + K * K * Cin * Lout) * 4)     # scratch
    vmem_limit = int(min(100 * 1024 * 1024, max(4 * 1024 * 1024, 2 * footprint)))

    out_flat = pl.pallas_call(
        functools.partial(_conv_bn_relu_kernel, K=K, H=H, W=W, Wp=Wp, pad=pad, Lout=Lout),
        out_shape=jax.ShapeDtypeStruct((N, Cout, Lout), x_nchw.dtype),
        grid_spec=pltpu.PrefetchScalarGridSpec(
            num_scalar_prefetch=0,
            grid=(N,),                                   # one image per step, parallel across TCs
            in_specs=[
                pl.BlockSpec((1, Cin, H * W), lambda n: (n, 0, 0)),       # image n (unpadded)
                pl.BlockSpec((Cout, K * K * Cin), lambda n: (0, 0)),      # folded weights (resident)
                pl.BlockSpec((Cout, 1), lambda n: (0, 0)),                # folded bias (resident)
            ],
            out_specs=pl.BlockSpec((1, Cout, Lout), lambda n: (n, 0, 0)),
            scratch_shapes=[
                pltpu.VMEM((Cin, Lxp), jnp.float32),                      # padded flat image
                pltpu.VMEM((K * K * Cin, Lout), jnp.float32),             # im2col operand
            ],
        ),
        compiler_params=pltpu.CompilerParams(
            dimension_semantics=("parallel",),
            vmem_limit_bytes=vmem_limit),
    )(x_flat, w2d, b_col)

    # ---- (N, Cout, H*Wp) -> (N, Cout, H, Wp) is a free reshape; only the cheap [..., :W]
    #      slice remains (drops the 2*pad garbage lanes per row; never read downstream).
    return out_flat.reshape(N, Cout, H, Wp)[..., :W]


def init_params(key, in_channels, out_channels, kernel=3):
    k1, k2, k3, k4, k5 = jax.random.split(key, 5)
    return {
        # Conv2d weight, PyTorch (Cout, Cin, K, K) layout; bias=False in the module.
        "w": 0.1 * jax.random.normal(
            k1, (out_channels, in_channels, kernel, kernel), jnp.float32),
        # BatchNorm2d affine params + running stats (eval mode).
        "gamma": 1.0 + 0.1 * jax.random.normal(k2, (out_channels,), jnp.float32),
        "beta": 0.05 * jax.random.normal(k3, (out_channels,), jnp.float32),
        "mean": 0.01 * jax.random.normal(k4, (out_channels,), jnp.float32),
        "var": 0.5 + jax.random.uniform(k5, (out_channels,), jnp.float32),
    }


def conv_bn_relu_reference(x, params, *, eps=1e-5):
    """Pure-JAX (unfused) reference: conv -> BN(eval) -> ReLU."""
    y = jax.lax.conv_general_dilated(
        x, params["w"], window_strides=(1, 1), padding="SAME",
        dimension_numbers=("NCHW", "OIHW", "NCHW"))
    scale = params["gamma"] * jax.lax.rsqrt(params["var"] + eps)
    shift = params["beta"] - params["mean"] * scale
    y = y * scale[None, :, None, None] + shift[None, :, None, None]
    return jnp.maximum(y, 0.0)


if __name__ == "__main__":
    key = jax.random.PRNGKey(0)
    kx, kp = jax.random.split(key)

    N, Cin, H, W = 2, 4, 16, 16
    Cout = 8

    x = jax.random.normal(kx, (N, Cin, H, W), jnp.float32)
    params = init_params(kp, Cin, Cout, kernel=3)

    out = jax.block_until_ready(conv_bn_relu_forward(x, params))
    ref = conv_bn_relu_reference(x, params)

    assert out.shape == (N, Cout, H, W)
    # bf16 MXU operands with f32 accumulation -> relaxed tolerance vs the f32 XLA reference
    # (indexing/tap bugs would produce O(0.3+) errors, well above this threshold).
    assert jnp.allclose(out, ref, atol=5e-2, rtol=5e-2), \
        float(jnp.max(jnp.abs(out - ref)))

    print("KERNEL_OK")
</pallas_src>

<mosaic_0001>
module attributes {stable_mosaic.version = 11 : i64} {
  func.func @_conv_bn_relu_kernel(%arg0: i32, %arg1: memref<1x4x256xf32, #tpu.memory_space<vmem>>, %arg2: memref<8x36xbf16, #tpu.memory_space<vmem>>, %arg3: memref<8x1xf32, #tpu.memory_space<vmem>>, %arg4: memref<1x8x288xf32, #tpu.memory_space<vmem>>, %arg5: memref<4x326xf32, #tpu.memory_space<vmem>>, %arg6: memref<36x288xf32, #tpu.memory_space<vmem>>) attributes {dimension_semantics = [#tpu.dimension_semantics<parallel>], iteration_bounds = array<i64: 2>, scalar_prefetch = 0 : i64, scratch_operands = 2 : i64, tpu.core_type = #tpu.core_type<tc>, window_params = [{transform_indices = @transform_0, window_bounds = array<i64: 1, 4, 256>}, {pipeline_mode = #tpu.pipeline_mode<synchronous>, transform_indices = @transform_1, window_bounds = array<i64: 8, 36>}, {pipeline_mode = #tpu.pipeline_mode<synchronous>, transform_indices = @transform_2, window_bounds = array<i64: 8, 1>}, {transform_indices = @transform_3, window_bounds = array<i64: 1, 8, 288>}]} {
    %cst = arith.constant 0.000000e+00 : f32
    %0 = vector.broadcast %cst : f32 to vector<4x326xf32>
    %c0 = arith.constant 0 : index
    %c0_0 = arith.constant 0 : index
    %1 = vector.load %arg5[%c0, %c0_0] : memref<4x326xf32, #tpu.memory_space<vmem>>, vector<4x326xf32>
    tpu.vector_store %arg5[%c0, %c0_0], %0 {strides = array<i32>} : memref<4x326xf32, #tpu.memory_space<vmem>>, vector<4x326xf32>,
    %c0_1 = arith.constant 0 : index
    %c0_2 = arith.constant 0 : index
    %c0_3 = arith.constant 0 : index
    %2 = vector.load %arg1[%c0_1, %c0_2, %c0_3] : memref<1x4x256xf32, #tpu.memory_space<vmem>>, vector<1x4x16xf32>
    %3 = vector.shape_cast %2 : vector<1x4x16xf32> to vector<4x16xf32>
    %c0_4 = arith.constant 0 : index
    %c19 = arith.constant 19 : index
    %4 = vector.load %arg5[%c0_4, %c19] : memref<4x326xf32, #tpu.memory_space<vmem>>, vector<4x16xf32>
    tpu.vector_store %arg5[%c0_4, %c19], %3 {strides = array<i32>} : memref<4x326xf32, #tpu.memory_space<vmem>>, vector<4x16xf32>,
    %c0_5 = arith.constant 0 : index
    %c0_6 = arith.constant 0 : index
    %c16 = arith.constant 16 : index
    %5 = vector.load %arg1[%c0_5, %c0_6, %c16] : memref<1x4x256xf32, #tpu.memory_space<vmem>>, vector<1x4x16xf32>
    %6 = vector.shape_cast %5 : vector<1x4x16xf32> to vector<4x16xf32>
    %c0_7 = arith.constant 0 : index
    %c37 = arith.constant 37 : index
    %7 = vector.load %arg5[%c0_7, %c37] : memref<4x326xf32, #tpu.memory_space<vmem>>, vector<4x16xf32>
    tpu.vector_store %arg5[%c0_7, %c37], %6 {strides = array<i32>} : memref<4x326xf32, #tpu.memory_space<vmem>>, vector<4x16xf32>,
    %c0_8 = arith.constant 0 : index
    %c0_9 = arith.constant 0 : index
    %c32 = arith.constant 32 : index
    %8 = vector.load %arg1[%c0_8, %c0_9, %c32] : memref<1x4x256xf32, #tpu.memory_space<vmem>>, vector<1x4x16xf32>
    %9 = vector.shape_cast %8 : vector<1x4x16xf32> to vector<4x16xf32>
    %c0_10 = arith.constant 0 : index
    %c55 = arith.constant 55 : index
    %10 = vector.load %arg5[%c0_10, %c55] : memref<4x326xf32, #tpu.memory_space<vmem>>, vector<4x16xf32>
    tpu.vector_store %arg5[%c0_10, %c55], %9 {strides = array<i32>} : memref<4x326xf32, #tpu.memory_space<vmem>>, vector<4x16xf32>,
    %c0_11 = arith.constant 0 : index
    %c0_12 = arith.constant 0 : index
    %c48 = arith.constant 48 : index
    %11 = vector.load %arg1[%c0_11, %c0_12, %c48] : memref<1x4x256xf32, #tpu.memory_space<vmem>>, vector<1x4x16xf32>
    %12 = vector.shape_cast %11 : vector<1x4x16xf32> to vector<4x16xf32>
    %c0_13 = arith.constant 0 : index
    %c73 = arith.constant 73 : index
    %13 = vector.load %arg5[%c0_13, %c73] : memref<4x326xf32, #tpu.memory_space<vmem>>, vector<4x16xf32>
    tpu.vector_store %arg5[%c0_13, %c73], %12 {strides = array<i32>} : memref<4x326xf32, #tpu.memory_space<vmem>>, vector<4x16xf32>,
    %c0_14 = arith.constant 0 : index
    %c0_15 = arith.constant 0 : index
    %c64 = arith.constant 64 : index
    %14 = vector.load %arg1[%c0_14, %c0_15, %c64] : memref<1x4x256xf32, #tpu.memory_space<vmem>>, vector<1x4x16xf32>
    %15 = vector.shape_cast %14 : vector<1x4x16xf32> to vector<4x16xf32>
    %c0_16 = arith.constant 0 : index
    %c91 = arith.constant 91 : index
    %16 = vector.load %arg5[%c0_16, %c91] : memref<4x326xf32, #tpu.memory_space<vmem>>, vector<4x16xf32>
    tpu.vector_store %arg5[%c0_16, %c91], %15 {strides = array<i32>} : memref<4x326xf32, #tpu.memory_space<vmem>>, vector<4x16xf32>,
    %c0_17 = arith.constant 0 : index
    %c0_18 = arith.constant 0 : index
    %c80 = arith.constant 80 : index
    %17 = vector.load %arg1[%c0_17, %c0_18, %c80] : memref<1x4x256xf32, #tpu.memory_space<vmem>>, vector<1x4x16xf32>
    %18 = vector.shape_cast %17 : vector<1x4x16xf32> to vector<4x16xf32>
    %c0_19 = arith.constant 0 : index
    %c109 = arith.constant 109 : index
    %19 = vector.load %arg5[%c0_19, %c109] : memref<4x326xf32, #tpu.memory_space<vmem>>, vector<4x16xf32>
    tpu.vector_store %arg5[%c0_19, %c109], %18 {strides = array<i32>} : memref<4x326xf32, #tpu.memory_space<vmem>>, vector<4x16xf32>,
    %c0_20 = arith.constant 0 : index
    %c0_21 = arith.constant 0 : index
    %c96 = arith.constant 96 : index
    %20 = vector.load %arg1[%c0_20, %c0_21, %c96] : memref<1x4x256xf32, #tpu.memory_space<vmem>>, vector<1x4x16xf32>
    %21 = vector.shape_cast %20 : vector<1x4x16xf32> to vector<4x16xf32>
    %c0_22 = arith.constant 0 : index
    %c127 = arith.constant 127 : index
    %22 = vector.load %arg5[%c0_22, %c127] : memref<4x326xf32, #tpu.memory_space<vmem>>, vector<4x16xf32>
    tpu.vector_store %arg5[%c0_22, %c127], %21 {strides = array<i32>} : memref<4x326xf32, #tpu.memory_space<vmem>>, vector<4x16xf32>,
    %c0_23 = arith.constant 0 : index
    %c0_24 = arith.constant 0 : index
    %c112 = arith.constant 112 : index
    %23 = vector.load %arg1[%c0_23, %c0_24, %c112] : memref<1x4x256xf32, #tpu.memory_space<vmem>>, vector<1x4x16xf32>
    %24 = vector.shape_cast %23 : vector<1x4x16xf32> to vector<4x16xf32>
    %c0_25 = arith.constant 0 : index
    %c145 = arith.constant 145 : index
    %25 = vector.load %arg5[%c0_25, %c145] : memref<4x326xf32, #tpu.memory_space<vmem>>, vector<4x16xf32>
    tpu.vector_store %arg5[%c0_25, %c145], %24 {strides = array<i32>} : memref<4x326xf32, #tpu.memory_space<vmem>>, vector<4x16xf32>,
    %c0_26 = arith.constant 0 : index
    %c0_27 = arith.constant 0 : index
    %c128 = arith.constant 128 : index
    %26 = vector.load %arg1[%c0_26, %c0_27, %c128] : memref<1x4x256xf32, #tpu.memory_space<vmem>>, vector<1x4x16xf32>
    %27 = vector.shape_cast %26 : vector<1x4x16xf32> to vector<4x16xf32>
    %c0_28 = arith.constant 0 : index
    %c163 = arith.constant 163 : index
    %28 = vector.load %arg5[%c0_28, %c163] : memref<4x326xf32, #tpu.memory_space<vmem>>, vector<4x16xf32>
    tpu.vector_store %arg5[%c0_28, %c163], %27 {strides = array<i32>} : memref<4x326xf32, #tpu.memory_space<vmem>>, vector<4x16xf32>,
    %c0_29 = arith.constant 0 : index
    %c0_30 = arith.constant 0 : index
    %c144 = arith.constant 144 : index
    %29 = vector.load %arg1[%c0_29, %c0_30, %c144] : memref<1x4x256xf32, #tpu.memory_space<vmem>>, vector<1x4x16xf32>
    %30 = vector.shape_cast %29 : vector<1x4x16xf32> to vector<4x16xf32>
    %c0_31 = arith.constant 0 : index
    %c181 = arith.constant 181 : index
    %31 = vector.load %arg5[%c0_31, %c181] : memref<4x326xf32, #tpu.memory_space<vmem>>, vector<4x16xf32>
    tpu.vector_store %arg5[%c0_31, %c181], %30 {strides = array<i32>} : memref<4x326xf32, #tpu.memory_space<vmem>>, vector<4x16xf32>,
    %c0_32 = arith.constant 0 : index
    %c0_33 = arith.constant 0 : index
    %c160 = arith.constant 160 : index
    %32 = vector.load %arg1[%c0_32, %c0_33, %c160] : memref<1x4x256xf32, #tpu.memory_space<vmem>>, vector<1x4x16xf32>
    %33 = vector.shape_cast %32 : vector<1x4x16xf32> to vector<4x16xf32>
    %c0_34 = arith.constant 0 : index
    %c199 = arith.constant 199 : index
    %34 = vector.load %arg5[%c0_34, %c199] : memref<4x326xf32, #tpu.memory_space<vmem>>, vector<4x16xf32>
    tpu.vector_store %arg5[%c0_34, %c199], %33 {strides = array<i32>} : memref<4x326xf32, #tpu.memory_space<vmem>>, vector<4x16xf32>,
    %c0_35 = arith.constant 0 : index
    %c0_36 = arith.constant 0 : index
    %c176 = arith.constant 176 : index
    %35 = vector.load %arg1[%c0_35, %c0_36, %c176] : memref<1x4x256xf32, #tpu.memory_space<vmem>>, vector<1x4x16xf32>
    %36 = vector.shape_cast %35 : vector<1x4x16xf32> to vector<4x16xf32>
    %c0_37 = arith.constant 0 : index
    %c217 = arith.constant 217 : index
    %37 = vector.load %arg5[%c0_37, %c217] : memref<4x326xf32, #tpu.memory_space<vmem>>, vector<4x16xf32>
    tpu.vector_store %arg5[%c0_37, %c217], %36 {strides = array<i32>} : memref<4x326xf32, #tpu.memory_space<vmem>>, vector<4x16xf32>,
    %c0_38 = arith.constant 0 : index
    %c0_39 = arith.constant 0 : index
    %c192 = arith.constant 192 : index
    %38 = vector.load %arg1[%c0_38, %c0_39, %c192] : memref<1x4x256xf32, #tpu.memory_space<vmem>>, vector<1x4x16xf32>
    %39 = vector.shape_cast %38 : vector<1x4x16xf32> to vector<4x16xf32>
    %c0_40 = arith.constant 0 : index
    %c235 = arith.constant 235 : index
    %40 = vector.load %arg5[%c0_40, %c235] : memref<4x326xf32, #tpu.memory_space<vmem>>, vector<4x16xf32>
    tpu.vector_store %arg5[%c0_40, %c235], %39 {strides = array<i32>} : memref<4x326xf32, #tpu.memory_space<vmem>>, vector<4x16xf32>,
    %c0_41 = arith.constant 0 : index
    %c0_42 = arith.constant 0 : index
    %c208 = arith.constant 208 : index
    %41 = vector.load %arg1[%c0_41, %c0_42, %c208] : memref<1x4x256xf32, #tpu.memory_space<vmem>>, vector<1x4x16xf32>
    %42 = vector.shape_cast %41 : vector<1x4x16xf32> to vector<4x16xf32>
    %c0_43 = arith.constant 0 : index
    %c253 = arith.constant 253 : index
    %43 = vector.load %arg5[%c0_43, %c253] : memref<4x326xf32, #tpu.memory_space<vmem>>, vector<4x16xf32>
    tpu.vector_store %arg5[%c0_43, %c253], %42 {strides = array<i32>} : memref<4x326xf32, #tpu.memory_space<vmem>>, vector<4x16xf32>,
    %c0_44 = arith.constant 0 : index
    %c0_45 = arith.constant 0 : index
    %c224 = arith.constant 224 : index
    %44 = vector.load %arg1[%c0_44, %c0_45, %c224] : memref<1x4x256xf32, #tpu.memory_space<vmem>>, vector<1x4x16xf32>
    %45 = vector.shape_cast %44 : vector<1x4x16xf32> to vector<4x16xf32>
    %c0_46 = arith.constant 0 : index
    %c271 = arith.constant 271 : index
    %46 = vector.load %arg5[%c0_46, %c271] : memref<4x326xf32, #tpu.memory_space<vmem>>, vector<4x16xf32>
    tpu.vector_store %arg5[%c0_46, %c271], %45 {strides = array<i32>} : memref<4x326xf32, #tpu.memory_space<vmem>>, vector<4x16xf32>,
    %c0_47 = arith.constant 0 : index
    %c0_48 = arith.constant 0 : index
    %c240 = arith.constant 240 : index
    %47 = vector.load %arg1[%c0_47, %c0_48, %c240] : memref<1x4x256xf32, #tpu.memory_space<vmem>>, vector<1x4x16xf32>
    %48 = vector.shape_cast %47 : vector<1x4x16xf32> to vector<4x16xf32>
    %c0_49 = arith.constant 0 : index
    %c289 = arith.constant 289 : index
    %49 = vector.load %arg5[%c0_49, %c289] : memref<4x326xf32, #tpu.memory_space<vmem>>, vector<4x16xf32>
    tpu.vector_store %arg5[%c0_49, %c289], %48 {strides = array<i32>} : memref<4x326xf32, #tpu.memory_space<vmem>>, vector<4x16xf32>,
    %c0_50 = arith.constant 0 : index
    %c0_51 = arith.constant 0 : index
    %50 = vector.load %arg5[%c0_50, %c0_51] : memref<4x326xf32, #tpu.memory_space<vmem>>, vector<4x288xf32>
    %c0_52 = arith.constant 0 : index
    %c0_53 = arith.constant 0 : index
    %51 = vector.load %arg6[%c0_52, %c0_53] : memref<36x288xf32, #tpu.memory_space<vmem>>, vector<4x288xf32>
    tpu.vector_store %arg6[%c0_52, %c0_53], %50 {strides = array<i32>} : memref<36x288xf32, #tpu.memory_space<vmem>>, vector<4x288xf32>,
    %c0_54 = arith.constant 0 : index
    %c1 = arith.constant 1 : index
    %52 = vector.load %arg5[%c0_54, %c1] : memref<4x326xf32, #tpu.memory_space<vmem>>, vector<4x288xf32>
    %c4 = arith.constant 4 : index
    %c0_55 = arith.constant 0 : index
    %53 = vector.load %arg6[%c4, %c0_55] : memref<36x288xf32, #tpu.memory_space<vmem>>, vector<4x288xf32>
    tpu.vector_store %arg6[%c4, %c0_55], %52 {strides = array<i32>} : memref<36x288xf32, #tpu.memory_space<vmem>>, vector<4x288xf32>,
    %c0_56 = arith.constant 0 : index
    %c2 = arith.constant 2 : index
    %54 = vector.load %arg5[%c0_56, %c2] : memref<4x326xf32, #tpu.memory_space<vmem>>, vector<4x288xf32>
    %c8 = arith.constant 8 : index
    %c0_57 = arith.constant 0 : index
    %55 = vector.load %arg6[%c8, %c0_57] : memref<36x288xf32, #tpu.memory_space<vmem>>, vector<4x288xf32>
    tpu.vector_store %arg6[%c8, %c0_57], %54 {strides = array<i32>} : memref<36x288xf32, #tpu.memory_space<vmem>>, vector<4x288xf32>,
    %c0_58 = arith.constant 0 : index
    %c18 = arith.constant 18 : index
    %56 = vector.load %arg5[%c0_58, %c18] : memref<4x326xf32, #tpu.memory_space<vmem>>, vector<4x288xf32>
    %c12 = arith.constant 12 : index
    %c0_59 = arith.constant 0 : index
    %57 = vector.load %arg6[%c12, %c0_59] : memref<36x288xf32, #tpu.memory_space<vmem>>, vector<4x288xf32>
    tpu.vector_store %arg6[%c12, %c0_59], %56 {strides = array<i32>} : memref<36x288xf32, #tpu.memory_space<vmem>>, vector<4x288xf32>,
    %c0_60 = arith.constant 0 : index
    %c19_61 = arith.constant 19 : index
    %58 = vector.load %arg5[%c0_60, %c19_61] : memref<4x326xf32, #tpu.memory_space<vmem>>, vector<4x288xf32>
    %c16_62 = arith.constant 16 : index
    %c0_63 = arith.constant 0 : index
    %59 = vector.load %arg6[%c16_62, %c0_63] : memref<36x288xf32, #tpu.memory_space<vmem>>, vector<4x288xf32>
    tpu.vector_store %arg6[%c16_62, %c0_63], %58 {strides = array<i32>} : memref<36x288xf32, #tpu.memory_space<vmem>>, vector<4x288xf32>,
    %c0_64 = arith.constant 0 : index
    %c20 = arith.constant 20 : index
    %60 = vector.load %arg5[%c0_64, %c20] : memref<4x326xf32, #tpu.memory_space<vmem>>, vector<4x288xf32>
    %c20_65 = arith.constant 20 : index
    %c0_66 = arith.constant 0 : index
    %61 = vector.load %arg6[%c20_65, %c0_66] : memref<36x288xf32, #tpu.memory_space<vmem>>, vector<4x288xf32>
    tpu.vector_store %arg6[%c20_65, %c0_66], %60 {strides = array<i32>} : memref<36x288xf32, #tpu.memory_space<vmem>>, vector<4x288xf32>,
    %c0_67 = arith.constant 0 : index
    %c36 = arith.constant 36 : index
    %62 = vector.load %arg5[%c0_67, %c36] : memref<4x326xf32, #tpu.memory_space<vmem>>, vector<4x288xf32>
    %c24 = arith.constant 24 : index
    %c0_68 = arith.constant 0 : index
    %63 = vector.load %arg6[%c24, %c0_68] : memref<36x288xf32, #tpu.memory_space<vmem>>, vector<4x288xf32>
    tpu.vector_store %arg6[%c24, %c0_68], %62 {strides = array<i32>} : memref<36x288xf32, #tpu.memory_space<vmem>>, vector<4x288xf32>,
    %c0_69 = arith.constant 0 : index
    %c37_70 = arith.constant 37 : index
    %64 = vector.load %arg5[%c0_69, %c37_70] : memref<4x326xf32, #tpu.memory_space<vmem>>, vector<4x288xf32>
    %c28 = arith.constant 28 : index
    %c0_71 = arith.constant 0 : index
    %65 = vector.load %arg6[%c28, %c0_71] : memref<36x288xf32, #tpu.memory_space<vmem>>, vector<4x288xf32>
    tpu.vector_store %arg6[%c28, %c0_71], %64 {strides = array<i32>} : memref<36x288xf32, #tpu.memory_space<vmem>>, vector<4x288xf32>,
    %c0_72 = arith.constant 0 : index
    %c38 = arith.constant 38 : index
    %66 = vector.load %arg5[%c0_72, %c38] : memref<4x326xf32, #tpu.memory_space<vmem>>, vector<4x288xf32>
    %c32_73 = arith.constant 32 : index
    %c0_74 = arith.constant 0 : index
    %67 = vector.load %arg6[%c32_73, %c0_74] : memref<36x288xf32, #tpu.memory_space<vmem>>, vector<4x288xf32>
    tpu.vector_store %arg6[%c32_73, %c0_74], %66 {strides = array<i32>} : memref<36x288xf32, #tpu.memory_space<vmem>>, vector<4x288xf32>,
    %c0_75 = arith.constant 0 : index
    %c0_76 = arith.constant 0 : index
    %68 = vector.load %arg2[%c0_75, %c0_76] : memref<8x36xbf16, #tpu.memory_space<vmem>>, vector<8x36xbf16>
    %c0_77 = arith.constant 0 : index
    %c0_78 = arith.constant 0 : index
    %69 = vector.load %arg6[%c0_77, %c0_78] : memref<36x288xf32, #tpu.memory_space<vmem>>, vector<36x288xf32>
    %70 = arith.truncf %69 : vector<36x288xf32> to vector<36x288xbf16>
    %cst_79 = arith.constant dense<0.000000e+00> : vector<8x288xf32>
    %71 = tpu.matmul %68, %70, %cst_79 {dimension_numbers = #tpu.dot_dimension_numbers<[1], [0], [0], [1], [0, 0, 1, 1], [], []>} : vector<8x36xbf16>, vector<36x288xbf16>, vector<8x288xf32> -> vector<8x288xf32>
    %c0_80 = arith.constant 0 : index
    %c0_81 = arith.constant 0 : index
    %72 = vector.load %arg3[%c0_80, %c0_81] : memref<8x1xf32, #tpu.memory_space<vmem>>, vector<8x1xf32>
    %73 = vector.broadcast %72 : vector<8x1xf32> to vector<8x288xf32>
    %74 = arith.addf %71, %73 : vector<8x288xf32>
    %cst_82 = arith.constant 0.000000e+00 : f32
    %75 = vector.broadcast %cst_82 : f32 to vector<8x288xf32>
    %76 = arith.maximumf %74, %75 : vector<8x288xf32>
    %c0_83 = arith.constant 0 : index
    %c0_84 = arith.constant 0 : index
    %c0_85 = arith.constant 0 : index
    %77 = vector.load %arg4[%c0_83, %c0_84, %c0_85] : memref<1x8x288xf32, #tpu.memory_space<vmem>>, vector<1x8x288xf32>
    %78 = vector.shape_cast %77 : vector<1x8x288xf32> to vector<8x288xf32>
    %79 = vector.shape_cast %76 : vector<8x288xf32> to vector<1x8x288xf32>
    tpu.vector_store %arg4[%c0_83, %c0_84, %c0_85], %79 {strides = array<i32>} : memref<1x8x288xf32, #tpu.memory_space<vmem>>, vector<1x8x288xf32>,
    return
  }
  func.func @transform_0(%arg0: i32) -> (i32, i32, i32) {
    %c0_i32 = arith.constant 0 : i32
    %c0_i32_0 = arith.constant 0 : i32
    %c0_i32_1 = arith.constant 0 : i32
    return %arg0, %c0_i32, %c0_i32_0 : i32, i32, i32
  }
  func.func @transform_1(%arg0: i32) -> (i32, i32) {
    %c0_i32 = arith.constant 0 : i32
    %c0_i32_0 = arith.constant 0 : i32
    %c0_i32_1 = arith.constant 0 : i32
    return %c0_i32, %c0_i32_0 : i32, i32
  }
  func.func @transform_2(%arg0: i32) -> (i32, i32) {
    %c0_i32 = arith.constant 0 : i32
    %c0_i32_0 = arith.constant 0 : i32
    %c0_i32_1 = arith.constant 0 : i32
    return %c0_i32, %c0_i32_0 : i32, i32
  }
  func.func @transform_3(%arg0: i32) -> (i32, i32, i32) {
    %c0_i32 = arith.constant 0 : i32
    %c0_i32_0 = arith.constant 0 : i32
    %c0_i32_1 = arith.constant 0 : i32
    return %arg0, %c0_i32, %c0_i32_0 : i32, i32, i32
  }
}

</mosaic_0001>

<llo_original>
// kernel: tpu_custom_call.1
$region0: #{tpu_custom_call.1}
  #allocation0 [shape = 'u32[]', space=smem, size = 0x4, offset = 0x4, fixed_abs, tag = 'smem constant byte address 0x4 - core index']
  #allocation1 [shape = 'u32[144,128]{1,0:T(1,128)}', space=vmem, size = 0x12000, scoped, tag = 'internal scratch']
  #allocation2 [shape = 'f32[4,326]{1,0:T(4,128)}', space=vmem, size = 0x1800, scoped, tag = 'scratch operand']
  #allocation3 [shape = 'f32[36,288]{1,0:T(8,128)}', space=vmem, size = 0xf000, scoped, tag = 'scratch operand']
  %s0 = inlined_call_operand.hbm [shape: f32[2,4,256], index: 0, kind: input, shape index: {}]
  %s1 = inlined_call_operand.vmem [shape: bf16[8,36], index: 1, kind: input, shape index: {}]
  %s2 = inlined_call_operand.vmem [shape: f32[8,1], index: 2, kind: input, shape index: {}]
  %s3 = inlined_call_operand.hbm [shape: f32[2,8,288], index: 3, kind: output, shape index: {}]
  %s4 = sld [smem:[#allocation0]]
  $region49: #{tpu_custom_call.1} parent=0
    _
  %s6 = ssub.s32 1, %s4
  %s7 = scalar_select 0, %s6, %s4
  $region1: #{tpu_custom_call.1} parent=0
    #allocation4 [shape = 'u8[8192]{0}', space=vmem, size = 0x2000, scoped, tag = 'input window, operand 0']
    #allocation5 [shape = 's32[2]{0}', space=sflag, size = 0x8, scoped, tag = 'scoped memory for tpu_custom_call.1']
    #allocation6 [shape = 's32[2]{0}', space=sflag, size = 0x8, scoped, tag = 'scoped memory for tpu_custom_call.1']
    #allocation7 [shape = 'u8[24576]{0}', space=vmem, size = 0x6000, scoped, tag = 'output window, operand 0']
    %8 = vsyncpa [#allocation5], 0
    %s9 = scalar_lea.sflag [#allocation5], 1
    %10 = vsyncpa %s9, 0
    %11 = vsyncpa [#allocation6], 0
    %s12 = scalar_lea.sflag [#allocation6], 1
    %13 = vsyncpa %s12, 0
    loop: start=0, step=1, limit=4
    $region2: #{tpu_custom_call.1} parent=1 // loop_pre_header
      _
    $region3: #{tpu_custom_call.1} parent=1 // loop_header
      %s15 = sphi 0, %s19
      %p16 = scmp.ge.s32.totalorder %s15, 4
      %s25 = sphi 0, %s27
      %s28 = sphi 0, %s25
      %s29 = sphi 0, %s28
      %s45 = sphi 0, %s29
      %s49 = sphi 0, %s49
      %s51 = sphi 0, %s49
      %s52 = sphi 0, %s51
      %s66 = sphi 0, %s52
      %s70 = sphi 0, %s70
      %s72 = sphi 0, %s70
      %s73 = sphi 0, %s72
      %s87 = sphi 0, %s73
      %s93 = sphi 0, %s95
      %s96 = sphi 0, %s93
      %s97 = sphi 0, %s96
      %s113 = sphi 0, %s97
    $region4: #{tpu_custom_call.1} parent=1 // loop_header_branch
      %18 = sbr.rel (%p16) target = $region8
    $region5: #{tpu_custom_call.1} parent=1 // loop_body
      %s20 = ssub.s32 %s15, 1
      %s21 = ssub.s32 %s15, 2
      %s22 = sadd.s32 %s15, 1
      %s23 = ssub.s32 %s15, %s22
      %p24 = scmp.eq.s32.totalorder %s23, 0
      %s26 = sadd.s32 %s25, 1
      %s27 = scalar_select %p24, %s25, %s26
      %p30 = pneg %p24
      %p31 = scmp.eq.s32.totalorder %s15, 1
      %p32 = por %p30, %p31
      %p33 = scmp.ne.s32.totalorder %s25, %s28
      %p34 = scmp.eq.s32.totalorder %s15, 0
      %p35 = por %p33, %p34
      %p36 = scmp.ne.s32.totalorder %s25, %s28
      %p37 = scmp.eq.s32.totalorder %s20, 1
      %p38 = por %p36, %p37
      %p39 = scmp.ne.s32.totalorder %s28, %s29
      %p40 = scmp.eq.s32.totalorder %s20, 0
      %p41 = por %p39, %p40
      %p42 = scmp.ne.s32.totalorder %s28, %s29
      %p43 = scmp.eq.s32.totalorder %s21, 1
      %p44 = por %p42, %p43
      %p46 = scmp.ne.s32.totalorder %s29, %s45
      %p47 = scmp.eq.s32.totalorder %s21, 0
      %p48 = por %p46, %p47
      %s50 = sadd.s32 %s49, 1
      %p53 = scmp.eq.s32.totalorder %s15, 1
      %p54 = scmp.ne.s32.totalorder %s49, %s51
      %p55 = scmp.eq.s32.totalorder %s15, 0
      %p56 = por %p54, %p55
      %p57 = scmp.ne.s32.totalorder %s49, %s51
      %p58 = scmp.eq.s32.totalorder %s20, 1
      %p59 = por %p57, %p58
      %p60 = scmp.ne.s32.totalorder %s51, %s52
      %p61 = scmp.eq.s32.totalorder %s20, 0
      %p62 = por %p60, %p61
      %p63 = scmp.ne.s32.totalorder %s51, %s52
      %p64 = scmp.eq.s32.totalorder %s21, 1
      %p65 = por %p63, %p64
      %p67 = scmp.ne.s32.totalorder %s52, %s66
      %p68 = scmp.eq.s32.totalorder %s21, 0
      %p69 = por %p67, %p68
      %s71 = sadd.s32 %s70, 1
      %p74 = scmp.eq.s32.totalorder %s15, 1
      %p75 = scmp.ne.s32.totalorder %s70, %s72
      %p76 = scmp.eq.s32.totalorder %s15, 0
      %p77 = por %p75, %p76
      %p78 = scmp.ne.s32.totalorder %s70, %s72
      %p79 = scmp.eq.s32.totalorder %s20, 1
      %p80 = por %p78, %p79
      %p81 = scmp.ne.s32.totalorder %s72, %s73
      %p82 = scmp.eq.s32.totalorder %s20, 0
      %p83 = por %p81, %p82
      %p84 = scmp.ne.s32.totalorder %s72, %s73
      %p85 = scmp.eq.s32.totalorder %s21, 1
      %p86 = por %p84, %p85
      %p88 = scmp.ne.s32.totalorder %s73, %s87
      %p89 = scmp.eq.s32.totalorder %s21, 0
      %p90 = por %p88, %p89
      %s91 = ssub.s32 %s15, %s22
      %p92 = scmp.eq.s32.totalorder %s91, 0
      %s94 = sadd.s32 %s93, 1
      %s95 = scalar_select %p92, %s93, %s94
      %p98 = pneg %p92
      %p99 = scmp.eq.s32.totalorder %s15, 1
      %p100 = por %p98, %p99
      %p101 = scmp.ne.s32.totalorder %s93, %s96
      %p102 = scmp.eq.s32.totalorder %s15, 0
      %p103 = por %p101, %p102
      %p104 = scmp.ne.s32.totalorder %s93, %s96
      %p105 = scmp.eq.s32.totalorder %s20, 1
      %p106 = por %p104, %p105
      %p107 = scmp.ne.s32.totalorder %s96, %s97
      %p108 = scmp.eq.s32.totalorder %s20, 0
      %p109 = por %p107, %p108
      %p110 = scmp.ne.s32.totalorder %s96, %s97
      %p111 = scmp.eq.s32.totalorder %s21, 1
      %p112 = por %p110, %p111
      %p114 = scmp.ne.s32.totalorder %s97, %s113
      %p115 = scmp.eq.s32.totalorder %s21, 0
      %p116 = por %p114, %p115
      %p117 = scmp.le.s32.totalorder 1, %s15
      %p118 = scmp.lt.s32.totalorder %s15, 3
      %p119 = pnand %p117, %p118
      %p120 = pneg %p119
      // Predicated region
      $region9: #{tpu_custom_call.1} parent=5 // pred_check
        _
      $region10: #{tpu_custom_call.1} parent=5 // pred_check_branch
        %122 = sbr.rel (%p119) target = $region12
      $region11: #{tpu_custom_call.1} parent=5 // pred_region
        %s123 = ssub.s32 %s15, 1
        // Predicated region
        $region13: #{tpu_custom_call.1} parent=11 // pred_check
          %p124 = pneg %p62
        $region14: #{tpu_custom_call.1} parent=11 // pred_check_branch
          %126 = sbr.rel (%p124) target = $region16
        $region15: #{tpu_custom_call.1} parent=11 // pred_region
          _
        $region16: #{tpu_custom_call.1} parent=11 // pred_fallthru
          _
        // Predicated region
        $region17: #{tpu_custom_call.1} parent=11 // pred_check
          %p127 = pneg %p83
        $region18: #{tpu_custom_call.1} parent=11 // pred_check_branch
          %129 = sbr.rel (%p127) target = $region20
        $region19: #{tpu_custom_call.1} parent=11 // pred_region
          _
        $region20: #{tpu_custom_call.1} parent=11 // pred_fallthru
          _
      $region12: #{tpu_custom_call.1} parent=5 // pred_fallthru
        _
      %p130 = scmp.lt.s32.totalorder %s15, 2
      // Predicated region
      $region21: #{tpu_custom_call.1} parent=5 // pred_check
        %p131 = pneg %p130
      $region22: #{tpu_custom_call.1} parent=5 // pred_check_branch
        %133 = sbr.rel (%p131) target = $region24
      $region23: #{tpu_custom_call.1} parent=5 // pred_region
        // Predicated region
        $region25: #{tpu_custom_call.1} parent=23 // pred_check
          %p134 = pneg %p35
        $region26: #{tpu_custom_call.1} parent=23 // pred_check_branch
          %136 = sbr.rel (%p134) target = $region28
        $region27: #{tpu_custom_call.1} parent=23 // pred_region
          %s137 = sand.u32 %s25, 1
          %s138 = scalar_lea.sflag [#allocation5], %s137
          %s139 = sand.u32 %s25, 1
          %s140 = smul.addr %s139, 8
          %s141 = scalar_lea.vmem [#allocation4], %s140
          %s143 = ssub.s32 128, 128
          %144 = vsyncadd %s138, %s143
          %s145 = smul.addr %s15, 2
          %s146 = smul.addr %s145, 64
          %s147 = scalar_lea.hbm %s0, %s146
          %s149 = sshll.u32 %s141, 4
          %s150 = int_to_ptr.vmem [resolvable:$true] %s149
          %152 = dma.hbm_to_vmem [thread:$0]  %s147, 128, %s150, %s138
        $region28: #{tpu_custom_call.1} parent=23 // pred_fallthru
          _
      $region24: #{tpu_custom_call.1} parent=5 // pred_fallthru
        _
      %p153 = scmp.le.s32.totalorder 1, %s15
      %p154 = scmp.lt.s32.totalorder %s15, 3
      %p155 = pnand %p153, %p154
      %p156 = pneg %p155
      // Predicated region
      $region29: #{tpu_custom_call.1} parent=5 // pred_check
        _
      $region30: #{tpu_custom_call.1} parent=5 // pred_check_branch
        %158 = sbr.rel (%p155) target = $region32
      $region31: #{tpu_custom_call.1} parent=5 // pred_region
        %s159 = ssub.s32 %s15, 1
        %s160 = sand.u32 %s28, 1
        %s161 = scalar_lea.sflag [#allocation5], %s160
        %s162 = sand.u32 %s28, 1
        %s163 = smul.addr %s162, 8
        %s164 = scalar_lea.vmem [#allocation4], %s163
        // Predicated region
        $region33: #{tpu_custom_call.1} parent=31 // pred_check
          %p165 = pneg %p41
        $region34: #{tpu_custom_call.1} parent=31 // pred_check_branch
          %167 = sbr.rel (%p165) target = $region36
        $region35: #{tpu_custom_call.1} parent=31 // pred_region
          %168 = dma.done %s161, 128
        $region36: #{tpu_custom_call.1} parent=31 // pred_fallthru
          _
        %s169 = sand.u32 %s28, 1
        %s170 = scalar_lea.sflag [#allocation5], %s169
        %s171 = sand.u32 %s28, 1
        %s172 = smul.addr %s171, 8
        %s173 = scalar_lea.vmem [#allocation4], %s172
        %p174 = pneg %p41
        %p175 = pneg %p38
        %p176 = pneg %p62
        %p177 = pneg %p59
        %p178 = pneg %p83
        %p179 = pneg %p80
        %p180 = pneg %p109
        %p181 = pneg %p106
        %s182 = sand.u32 %s96, 1
        %s183 = scalar_lea.sflag [#allocation6], %s182
        %s184 = sand.u32 %s96, 1
        %s185 = smul.addr %s184, 24
        %s186 = scalar_lea.vmem [#allocation7], %s185
        %188 = vst [vmem:[#allocation2] sm:$0xff] 0.0
        %vm189 = vcmask 568320
        %190 = vst.msk [vmem:[#allocation2 + $0x8] sm:$0xf] %vm189, 0.0
        %v191 = vld [vmem:[%s164] sm:$0xf]
        %193 = vrot.lane.b32.xlu0 %v191, 19
        %v194 = vpop.permute.xlu0 %193
        %vm196 = vcmask 281752
        %197 = vst.msk [vmem:[#allocation2] sm:$0xf] %vm196, %v194
        %v198 = vld [vmem:[%s164] sm:$0xf]
        %200 = vrot.lane.b32.xlu0 %v198, 21
        %v201 = vpop.permute.xlu0 %200
        %vm203 = vcmask 429352
        %204 = vst.msk [vmem:[#allocation2] sm:$0xf] %vm203, %v201
        %v205 = vld [vmem:[%s164] sm:$0xf]
        %207 = vrot.lane.b32.xlu0 %v205, 23
        %v208 = vpop.permute.xlu0 %207
        %vm210 = vcmask 576952
        %211 = vst.msk [vmem:[#allocation2] sm:$0xf] %vm210, %v208
        %v212 = vld [vmem:[%s164] sm:$0xf]
        %214 = vrot.lane.b32.xlu0 %v212, 25
        %v215 = vpop.permute.xlu0 %214
        %vm217 = vcmask 724552
        %218 = vst.msk [vmem:[#allocation2] sm:$0xf] %vm217, %v215
        %v219 = vld [vmem:[%s164] sm:$0xf]
        %221 = vrot.lane.b32.xlu0 %v219, 27
        %v222 = vpop.permute.xlu0 %221
        %vm224 = vcmask 872152
        %225 = vst.msk [vmem:[#allocation2] sm:$0xf] %vm224, %v222
        %v226 = vld [vmem:[%s164] sm:$0xf]
        %228 = vrot.lane.b32.xlu0 %v226, 29
        %v229 = vpop.permute.xlu0 %228
        %vm231 = vcmask 1019752
        %232 = vst.msk [vmem:[#allocation2] sm:$0xf] %vm231, %v229
        %v233 = vld [vmem:[%s164] sm:$0xf]
        %235 = vrot.lane.b32.xlu0 %v233, 31
        %v236 = vpop.permute.xlu0 %235
        %v237 = vrot.slane %v236, 4
        %vm238 = vcmask 252928
        %v239 = vsel %vm238, %v237, %v236
        %vm241 = vcmask 1044472
        %vm242 = vcmask 121860
        %vm243 = vmor %vm242, %vm241
        %244 = vst.msk [vmem:[#allocation2] sm:$0xff] %vm243, %v239
        %v245 = vld [vmem:[%s164] sm:$0xf]
        %247 = vrot.lane.b32.xlu0 %v245, 33
        %v248 = vpop.permute.xlu0 %247
        %vm250 = vcmask 265352
        %251 = vst.msk [vmem:[#allocation2 + $0x4] sm:$0xf] %vm250, %v248
        %v252 = vld [vmem:[%s164 + $0x4] sm:$0xf]
        %254 = vrot.lane.b32.xlu0 %v252, 35
        %v255 = vpop.permute.xlu0 %254
        %vm257 = vcmask 412952
        %258 = vst.msk [vmem:[#allocation2 + $0x4] sm:$0xf] %vm257, %v255
        %v259 = vld [vmem:[%s164 + $0x4] sm:$0xf]
        %261 = vrot.lane.b32.xlu0 %v259, 37
        %v262 = vpop.permute.xlu0 %261
        %vm264 = vcmask 560552
        %265 = vst.msk [vmem:[#allocation2 + $0x4] sm:$0xf] %vm264, %v262
        %v266 = vld [vmem:[%s164 + $0x4] sm:$0xf]
        %268 = vrot.lane.b32.xlu0 %v266, 39
        %v269 = vpop.permute.xlu0 %268
        %vm271 = vcmask 708152
        %272 = vst.msk [vmem:[#allocation2 + $0x4] sm:$0xf] %vm271, %v269
        %v273 = vld [vmem:[%s164 + $0x4] sm:$0xf]
        %275 = vrot.lane.b32.xlu0 %v273, 41
        %v276 = vpop.permute.xlu0 %275
        %vm278 = vcmask 855752
        %279 = vst.msk [vmem:[#allocation2 + $0x4] sm:$0xf] %vm278, %v276
        %v280 = vld [vmem:[%s164 + $0x4] sm:$0xf]
        %282 = vrot.lane.b32.xlu0 %v280, 43
        %v283 = vpop.permute.xlu0 %282
        %vm285 = vcmask 1003352
        %286 = vst.msk [vmem:[#allocation2 + $0x4] sm:$0xf] %vm285, %v283
        %v287 = vld [vmem:[%s164 + $0x4] sm:$0xf]
        %289 = vrot.lane.b32.xlu0 %v287, 45
        %v290 = vpop.permute.xlu0 %289
        %v291 = vrot.slane %v290, 4
        %vm292 = vcmask 367616
        %v293 = vsel %vm292, %v291, %v290
        %vm295 = vcmask 1044456
        %vm296 = vcmask 105476
        %vm297 = vmor %vm296, %vm295
        %298 = vst.msk [vmem:[#allocation2 + $0x4] sm:$0xff] %vm297, %v293
        %v299 = vld [vmem:[%s164 + $0x4] sm:$0xf]
        %301 = vrot.lane.b32.xlu0 %v299, 47
        %v302 = vpop.permute.xlu0 %301
        %vm304 = vcmask 248952
        %305 = vst.msk [vmem:[#allocation2 + $0x8] sm:$0xf] %vm304, %v302
        %v306 = vld [vmem:[%s164 + $0x4] sm:$0xf]
        %308 = vrot.lane.b32.xlu0 %v306, 49
        %v309 = vpop.permute.xlu0 %308
        %vm311 = vcmask 396552
        %312 = vst.msk [vmem:[#allocation2 + $0x8] sm:$0xf] %vm311, %v309
        %v313 = vld [vmem:[#allocation2] sm:$0xff]
        %v314 = vld [vmem:[#allocation2 + $0x8] sm:$0xf]
        %v316 = vcombine.high %v313, %v313
        %318 = vst [vmem:[#allocation3] sm:$0xf] %v313
        %319 = vst [vmem:[#allocation3 + $0x8] sm:$0xf] %v316
        %vm320 = vcmask 257024
        %321 = vst.msk [vmem:[#allocation3 + $0x10] sm:$0xf] %vm320, %v314
        %v322 = vld [vmem:[#allocation2] sm:$0xff]
        %v323 = vld [vmem:[#allocation2 + $0x8] sm:$0xf]
        %v326 = vcombine.low %v322, %v322
        %v327 = vcombine.low %v323, %v323
        %328 = vrot.lane.b32.xlu0 %v326, 127
        %v329 = vpop.permute.xlu0 %328
        %330 = vrot.lane.b32.xlu0 %v322, 127
        %v331 = vpop.permute.xlu0 %330
        %332 = vrot.lane.b32.xlu0 %v327, 127
        %v333 = vpop.permute.xlu0 %332
        %vm334 = vcmask 1039360
        %v335 = vsel %vm334, %v329, %v331
        %v336 = vsel %vm334, %v331, %v333
        %340 = vst [vmem:[#allocation3] sm:$0xf0] %v335
        %341 = vst [vmem:[#allocation3 + $0x8] sm:$0xf0] %v336
        %vm342 = vcmask 261124
        %343 = vst.msk [vmem:[#allocation3 + $0x10] sm:$0xf0] %vm342, %v333
        %v344 = vld [vmem:[#allocation2] sm:$0xff]
        %v345 = vld [vmem:[#allocation2 + $0x8] sm:$0xf]
        %v348 = vcombine.high %v344, %v344
        %349 = vrot.lane.b32.xlu0 %v344, 126
        %v350 = vpop.permute.xlu0 %349
        %351 = vrot.lane.b32.xlu0 %v348, 126
        %v352 = vpop.permute.xlu0 %351
        %353 = vrot.lane.b32.xlu0 %v345, 126
        %v354 = vpop.permute.xlu0 %353
        %vm355 = vcmask 1031168
        %v356 = vsel %vm355, %v350, %v352
        %v357 = vsel %vm355, %v352, %v354
        %361 = vst [vmem:[#allocation3 + $0x18] sm:$0xf] %v356
        %362 = vst [vmem:[#allocation3 + $0x20] sm:$0xf] %v357
        %363 = vst.msk [vmem:[#allocation3 + $0x28] sm:$0xf] %vm320, %v354
        %v364 = vld [vmem:[#allocation2] sm:$0xff]
        %v365 = vld [vmem:[#allocation2 + $0x8] sm:$0xf]
        %v368 = vcombine.low %v364, %v364
        %v369 = vcombine.low %v365, %v365
        %370 = vrot.lane.b32.xlu0 %v368, 110
        %v371 = vpop.permute.xlu0 %370
        %372 = vrot.lane.b32.xlu0 %v364, 110
        %v373 = vpop.permute.xlu0 %372
        %374 = vrot.lane.b32.xlu0 %v369, 110
        %v375 = vpop.permute.xlu0 %374
        %vm376 = vcmask 900096
        %v377 = vsel %vm376, %v371, %v373
        %v378 = vsel %vm376, %v373, %v375
        %382 = vst [vmem:[#allocation3 + $0x18] sm:$0xf0] %v377
        %383 = vst [vmem:[#allocation3 + $0x20] sm:$0xf0] %v378
        %384 = vst.msk [vmem:[#allocation3 + $0x28] sm:$0xf0] %vm342, %v375
        %v385 = vld [vmem:[#allocation2] sm:$0xff]
        %v386 = vld [vmem:[#allocation2 + $0x8] sm:$0xf]
        %v389 = vcombine.high %v385, %v385
        %390 = vrot.lane.b32.xlu0 %v385, 109
        %v391 = vpop.permute.xlu0 %390
        %392 = vrot.lane.b32.xlu0 %v389, 109
        %v393 = vpop.permute.xlu0 %392
        %394 = vrot.lane.b32.xlu0 %v386, 109
        %v395 = vpop.permute.xlu0 %394
        %vm396 = vcmask 891904
        %v397 = vsel %vm396, %v391, %v393
        %v398 = vsel %vm396, %v393, %v395
        %402 = vst [vmem:[#allocation3 + $0x30] sm:$0xf] %v397
        %403 = vst [vmem:[#allocation3 + $0x38] sm:$0xf] %v398
        %404 = vst.msk [vmem:[#allocation3 + $0x40] sm:$0xf] %vm320, %v395
        %v405 = vld [vmem:[#allocation2] sm:$0xff]
        %v406 = vld [vmem:[#allocation2 + $0x8] sm:$0xf]
        %v409 = vcombine.low %v405, %v405
        %v410 = vcombine.low %v406, %v406
        %411 = vrot.lane.b32.xlu0 %v409, 108
        %v412 = vpop.permute.xlu0 %411
        %413 = vrot.lane.b32.xlu0 %v405, 108
        %v414 = vpop.permute.xlu0 %413
        %415 = vrot.lane.b32.xlu0 %v410, 108
        %v416 = vpop.permute.xlu0 %415
        %vm417 = vcmask 883712
        %v418 = vsel %vm417, %v412, %v414
        %v419 = vsel %vm417, %v414, %v416
        %423 = vst [vmem:[#allocation3 + $0x30] sm:$0xf0] %v418
        %424 = vst [vmem:[#allocation3 + $0x38] sm:$0xf0] %v419
        %425 = vst.msk [vmem:[#allocation3 + $0x40] sm:$0xf0] %vm342, %v416
        %v426 = vld [vmem:[#allocation2] sm:$0xff]
        %v427 = vld [vmem:[#allocation2 + $0x8] sm:$0xf]
        %v430 = vcombine.high %v426, %v426
        %431 = vrot.lane.b32.xlu0 %v426, 92
        %v432 = vpop.permute.xlu0 %431
        %433 = vrot.lane.b32.xlu0 %v430, 92
        %v434 = vpop.permute.xlu0 %433
        %435 = vrot.lane.b32.xlu0 %v427, 92
        %v436 = vpop.permute.xlu0 %435
        %vm437 = vcmask 752640
        %v438 = vsel %vm437, %v432, %v434
        %v439 = vsel %vm437, %v434, %v436
        %443 = vst [vmem:[#allocation3 + $0x48] sm:$0xf] %v438
        %444 = vst [vmem:[#allocation3 + $0x50] sm:$0xf] %v439
        %445 = vst.msk [vmem:[#allocation3 + $0x58] sm:$0xf] %vm320, %v436
        %v446 = vld [vmem:[#allocation2] sm:$0xff]
        %v447 = vld [vmem:[#allocation2 + $0x8] sm:$0xf]
        %v450 = vcombine.low %v446, %v446
        %v451 = vcombine.low %v447, %v447
        %452 = vrot.lane.b32.xlu0 %v450, 91
        %v453 = vpop.permute.xlu0 %452
        %454 = vrot.lane.b32.xlu0 %v446, 91
        %v455 = vpop.permute.xlu0 %454
        %456 = vrot.lane.b32.xlu0 %v451, 91
        %v457 = vpop.permute.xlu0 %456
        %vm458 = vcmask 744448
        %v459 = vsel %vm458, %v453, %v455
        %v460 = vsel %vm458, %v455, %v457
        %464 = vst [vmem:[#allocation3 + $0x48] sm:$0xf0] %v459
        %465 = vst [vmem:[#allocation3 + $0x50] sm:$0xf0] %v460
        %466 = vst.msk [vmem:[#allocation3 + $0x58] sm:$0xf0] %vm342, %v457
        %v467 = vld [vmem:[#allocation2] sm:$0xff]
        %v468 = vld [vmem:[#allocation2 + $0x8] sm:$0xf]
        %v471 = vcombine.high %v467, %v467
        %472 = vrot.lane.b32.xlu0 %v467, 90
        %v473 = vpop.permute.xlu0 %472
        %474 = vrot.lane.b32.xlu0 %v471, 90
        %v475 = vpop.permute.xlu0 %474
        %476 = vrot.lane.b32.xlu0 %v468, 90
        %v477 = vpop.permute.xlu0 %476
        %vm478 = vcmask 736256
        %v479 = vsel %vm478, %v473, %v475
        %v480 = vsel %vm478, %v475, %v477
        %484 = vst [vmem:[#allocation3 + $0x60] sm:$0xf] %v479
        %485 = vst [vmem:[#allocation3 + $0x68] sm:$0xf] %v480
        %486 = vst.msk [vmem:[#allocation3 + $0x70] sm:$0xf] %vm320, %v477
        %v487 = vld [vmem:[%s1] sm:$0xf]
        %v488 = vld [vmem:[#allocation3] sm:$0xff]
        %v489 = vld [vmem:[#allocation3 + $0x8] sm:$0xff]
        %v490 = vld [vmem:[#allocation3 + $0x10] sm:$0xff]
        %v491 = vld [vmem:[#allocation3 + $0x18] sm:$0xff]
        %v492 = vld [vmem:[#allocation3 + $0x20] sm:$0xff]
        %v493 = vld [vmem:[#allocation3 + $0x28] sm:$0xff]
        %v494 = vld [vmem:[#allocation3 + $0x30] sm:$0xff]
        %v495 = vld [vmem:[#allocation3 + $0x38] sm:$0xff]
        %v496 = vld [vmem:[#allocation3 + $0x40] sm:$0xff]
        %v497 = vld [vmem:[#allocation3 + $0x48] sm:$0xff]
        %v498 = vld [vmem:[#allocation3 + $0x50] sm:$0xff]
        %v499 = vld [vmem:[#allocation3 + $0x58] sm:$0xff]
        %v500 = vld [vmem:[#allocation3 + $0x60] sm:$0xf]
        %v501 = vld [vmem:[#allocation3 + $0x68] sm:$0xf]
        %v502 = vld [vmem:[#allocation3 + $0x70] sm:$0xf]
        %v503 = vpack.c.bf16 %v491, %v488
        %v504 = vpack.c.bf16 %v492, %v489
        %v505 = vpack.c.bf16 %v493, %v490
        %v506 = vpack.c.bf16 %v497, %v494
        %v507 = vpack.c.bf16 %v498, %v495
        %v508 = vpack.c.bf16 %v499, %v496
        %v509 = vpack.c.bf16 %v500, %v500
        %v510 = vpack.c.bf16 %v501, %v501
        %v511 = vpack.c.bf16 %v502, %v502
        %v512 = vld [vmem:[%s2] sm:$0xff]
        %514 = vset.pattern.permute.xlu0 0
        %515 = vperm.xlu0 %514, %v512
        %v516 = vpop.permute.xlu0 %515
        %vm518 = vcmask 293888
        %v520 = vsel %vm518, %v487, 0
        %vm522 = vcmask 1041408
        %v524 = vsel %vm522, %v509, 0
        %v527 = vsel %vm522, %v510, 0
        %v530 = vsel %vm522, %v511, 0
        %532 = vmatprep.subr.bf16.mxu0 %v504
        %533 = vmatpush1.bf16.msra.mxu0 %v503
        %534 = vmatprep.subr.bf16.mxu0 %v507
        %535 = vmatpush1.bf16.msra.mxu0 %v506
        %536 = vmatprep.subr.bf16.mxu0 %v527
        %537 = vmatpush1.bf16.msra.mxu0 %v524
        %538 = vmatprep.subr.bf16.mxu0 0
        %539 = vmatpush1.bf16.msra.mxu0 0
        %540 = vmatprep.subr.bf16.mxu0 0
        %541 = vmatpush1.bf16.msra.mxu0 0
        %542 = vmatprep.subr.bf16.mxu0 0
        %543 = vmatpush1.bf16.msra.mxu0 0
        %544 = vmatprep.subr.bf16.mxu0 0
        %545 = vmatpush1.bf16.msra.mxu0 0
        %546 = vmatprep.subr.bf16.mxu0 0
        %547 = vmatpush1.bf16.msra.mxu0 0
        %548 = vmatprep.subr.bf16.mxu0 0
        %549 = vmatpush1.bf16.msra.mxu0 0
        %550 = vmatprep.subr.bf16.mxu0 0
        %551 = vmatpush1.bf16.msra.mxu0 0
        %552 = vmatprep.subr.bf16.mxu0 0
        %553 = vmatpush1.bf16.msra.mxu0 0
        %554 = vmatprep.subr.bf16.mxu0 0
        %555 = vmatpush1.bf16.msra.mxu0 0
        %556 = vmatprep.subr.bf16.mxu0 0
        %557 = vmatpush1.bf16.msra.mxu0 0
        %558 = vmatprep.subr.bf16.mxu0 0
        %559 = vmatpush1.bf16.msra.mxu0 0
        %560 = vmatprep.subr.bf16.mxu0 0
        %561 = vmatpush1.bf16.msra.mxu0 0
        %562 = vmatprep.subr.bf16.mxu0 0
        %563 = vmatpush1.bf16.msra.mxu0 0
        %564 = vmatprep.mubr.bf16.mxu0 0
        %565 = vmatmul.mubr.bf16.gmra.mrb[0].mxu0 %v520
        %v566 = vpop.f32.mrb[0].mxu0
        %v567 = vadd.f32 %v516, %v566
        %v568 = vpop.f32.mrb[0].mxu0
        %v569 = vadd.f32 %v516, %v568
        %v570 = vpop.f32.mrb[0].mxu0
        %v571 = vpop.f32.mrb[0].mxu0
        %572 = vdwg.mxu0
        %573 = vmatprep.subr.bf16.mxu0 0
        %574 = vmatpush1.bf16.msra.mxu0 %v505
        %575 = vmatprep.subr.bf16.mxu0 0
        %576 = vmatpush1.bf16.msra.mxu0 %v508
        %577 = vmatprep.subr.bf16.mxu0 0
        %578 = vmatpush1.bf16.msra.mxu0 %v530
        %579 = vmatprep.subr.bf16.mxu0 0
        %580 = vmatpush1.bf16.msra.mxu0 0
        %581 = vmatprep.subr.bf16.mxu0 0
        %582 = vmatpush1.bf16.msra.mxu0 0
        %583 = vmatprep.subr.bf16.mxu0 0
        %584 = vmatpush1.bf16.msra.mxu0 0
        %585 = vmatprep.subr.bf16.mxu0 0
        %586 = vmatpush1.bf16.msra.mxu0 0
        %587 = vmatprep.subr.bf16.mxu0 0
        %588 = vmatpush1.bf16.msra.mxu0 0
        %589 = vmatprep.subr.bf16.mxu0 0
        %590 = vmatpush1.bf16.msra.mxu0 0
        %591 = vmatprep.subr.bf16.mxu0 0
        %592 = vmatpush1.bf16.msra.mxu0 0
        %593 = vmatprep.subr.bf16.mxu0 0
        %594 = vmatpush1.bf16.msra.mxu0 0
        %595 = vmatprep.subr.bf16.mxu0 0
        %596 = vmatpush1.bf16.msra.mxu0 0
        %597 = vmatprep.subr.bf16.mxu0 0
        %598 = vmatpush1.bf16.msra.mxu0 0
        %599 = vmatprep.subr.bf16.mxu0 0
        %600 = vmatpush1.bf16.msra.mxu0 0
        %601 = vmatprep.subr.bf16.mxu0 0
        %602 = vmatpush1.bf16.msra.mxu0 0
        %603 = vmatprep.subr.bf16.mxu0 0
        %604 = vmatpush1.bf16.msra.mxu0 0
        %605 = vmatprep.mubr.bf16.mxu0 0
        %606 = vmatmul.mubr.bf16.gmra.mrb[0].mxu0 %v520
        %v607 = vpop.f32.mrb[0].mxu0
        %v608 = vadd.f32 %v516, %v607
        %v609 = vpop.f32.mrb[0].mxu0
        %v610 = vpop.f32.mrb[0].mxu0
        %v611 = vpop.f32.mrb[0].mxu0
        %612 = vdwg.mxu0
        %v613 = vmax.f32 %v567, 0.0
        %v614 = vmax.f32 %v569, 0.0
        %v615 = vmax.f32 %v608, 0.0
        %616 = vst [vmem:[%s186] sm:$0xff] %v613
        %617 = vst [vmem:[%s186 + $0x8] sm:$0xff] %v614
        %vm618 = vcmask 261120
        %619 = vst.msk [vmem:[%s186 + $0x10] sm:$0xff] %vm618, %v615
        %s620 = sand.u32 %s96, 1
        %s621 = scalar_lea.sflag [#allocation6], %s620
        %s622 = sand.u32 %s96, 1
        %s623 = smul.addr %s622, 24
        %s624 = scalar_lea.vmem [#allocation7], %s623
        // Predicated region
        $region37: #{tpu_custom_call.1} parent=31 // pred_check
          %p625 = pneg %p106
        $region38: #{tpu_custom_call.1} parent=31 // pred_check_branch
          %627 = sbr.rel (%p625) target = $region40
        $region39: #{tpu_custom_call.1} parent=31 // pred_region
          %s629 = ssub.s32 384, 384
          %630 = vsyncadd %s621, %s629
          %s631 = smul.addr %s20, 3
          %s632 = smul.addr %s631, 128
          %s633 = scalar_lea.hbm %s3, %s632
          %s635 = sshll.u32 %s624, 4
          %s636 = int_to_ptr.vmem [resolvable:$true] %s635
          %638 = dma.vmem_to_hbm [thread:$0]  %s636, 384, %s633, %s621
        $region40: #{tpu_custom_call.1} parent=31 // pred_fallthru
          _
      $region32: #{tpu_custom_call.1} parent=5 // pred_fallthru
        _
      %p639 = scmp.le.s32.totalorder 2, %s15
      // Predicated region
      $region41: #{tpu_custom_call.1} parent=5 // pred_check
        %p640 = pneg %p639
      $region42: #{tpu_custom_call.1} parent=5 // pred_check_branch
        %642 = sbr.rel (%p640) target = $region44
      $region43: #{tpu_custom_call.1} parent=5 // pred_region
        %s643 = ssub.s32 %s15, 2
        // Predicated region
        $region45: #{tpu_custom_call.1} parent=43 // pred_check
          %p644 = pneg %p112
        $region46: #{tpu_custom_call.1} parent=43 // pred_check_branch
          %646 = sbr.rel (%p644) target = $region48
        $region47: #{tpu_custom_call.1} parent=43 // pred_region
          %s647 = sand.u32 %s97, 1
          %s648 = scalar_lea.sflag [#allocation6], %s647
          %s649 = sand.u32 %s97, 1
          %s650 = smul.addr %s649, 24
          %s651 = scalar_lea.vmem [#allocation7], %s650
          %652 = dma.done %s648, 384
        $region48: #{tpu_custom_call.1} parent=43 // pred_fallthru
          _
      $region44: #{tpu_custom_call.1} parent=5 // pred_fallthru
        _
    $region6: #{tpu_custom_call.1} parent=1 // loop_footer
      %s19 = sadd.s32 1, %s15
    $region7: #{tpu_custom_call.1} parent=1 // loop_footer_branch
      %14 = sbr.rel target = $region3
    $region8: #{tpu_custom_call.1} parent=1 // loop_exit
      _
    %653 = vsyncpa [#allocation5], 1
    %s654 = scalar_lea.sflag [#allocation5], 1
    %655 = vsyncpa %s654, 1
    %656 = vsyncpa [#allocation6], 1
    %s657 = scalar_lea.sflag [#allocation6], 1
    %658 = vsyncpa %s657, 1

</llo_original>
